<compile_context>
chip_gen: v5e
topology: v5e:2x2
jax: 0.10.0
libtpu: 0.0.40
codegen_flags: <defaults>
</compile_context>

<pallas_src>
import jax
import jax.numpy as jnp
from jax.experimental import pallas as pl
from jax.experimental.pallas import tpu as pltpu


def _deconv1x1_kernel(x_ref, w_ref, b_ref, o_ref):
    # x_ref: (TM, H2), w_ref: (H2, C_out), b_ref: (1, C_out), o_ref: (TM, C_out)
    acc = jnp.dot(x_ref[...], w_ref[...], preferred_element_type=jnp.float32)
    # Single bias add per tile (no inner loop to hoist out of); one VPU add.
    o_ref[...] = (acc + b_ref[...]).astype(o_ref.dtype)


def _choose_tile_m(m):
    # Largest tile <= 2048 that is either the full M (always a legal block shape)
    # or a multiple of 8 (f32 sublane).  Big tiles amortize the ~0.35 us/step
    # overhead (v5e) while staying far below the v7x VMEM budget double-buffered.
    if m <= 2048:
        return m
    return 2048


def tae_decoder_forward(features, weight, bias, *, input_dtype=None):
    """
    features: (B, T, H2)
    weight:   (H2, C_out)   -- ConvTranspose1d weight[:, :, 0] (in_channels, out_channels)
    bias:     (C_out,)
    returns:  (B, T, C_out)
    """
    B, T, H2 = features.shape
    C_out = weight.shape[1]
    out_dtype = features.dtype

    M = B * T
    x2d = features.reshape(M, H2)
    b2d = bias.reshape(1, C_out).astype(jnp.float32)

    # Optional bandwidth saver (e.g. jnp.bfloat16 on v6e/v7x); accumulation stays f32.
    if input_dtype is not None:
        x2d = x2d.astype(input_dtype)
        weight = weight.astype(input_dtype)

    tm = _choose_tile_m(M)
    grid = (pl.cdiv(M, tm),)

    in_itemsize = jnp.dtype(x2d.dtype).itemsize
    cost = pl.CostEstimate(
        flops=2 * M * H2 * C_out,
        transcendentals=0,
        bytes_accessed=(M * H2 + H2 * C_out) * in_itemsize
        + C_out * 4
        + M * C_out * jnp.dtype(out_dtype).itemsize,
    )

    out2d = pl.pallas_call(
        _deconv1x1_kernel,
        out_shape=jax.ShapeDtypeStruct((M, C_out), out_dtype),
        grid=grid,
        in_specs=[
            pl.BlockSpec((tm, H2), lambda i: (i, 0)),      # streamed, double-buffered
            pl.BlockSpec((H2, C_out), lambda i: (0, 0)),   # VMEM-resident weight
            pl.BlockSpec((1, C_out), lambda i: (0, 0)),    # VMEM-resident bias
        ],
        out_specs=pl.BlockSpec((tm, C_out), lambda i: (i, 0)),
        compiler_params=pltpu.CompilerParams(
            dimension_semantics=("parallel",),
        ),
        cost_estimate=cost,
    )(x2d, weight, b2d)

    return out2d.reshape(B, T, C_out)


if __name__ == "__main__":
    # Module config: filter_lstm = [64, 32] -> hidden_lstm_2 = 32, out_channels = 28
    hidden_lstm_1, hidden_lstm_2 = 64, 32
    C_out = 28
    B, T = 2, 8

    key = jax.random.PRNGKey(0)
    k_x, k_w, k_b = jax.random.split(key, 3)

    # ConvTranspose1d weight shape: (in_channels, out_channels, kernel_size=1)
    weight_full = jax.random.normal(k_w, (hidden_lstm_2, C_out, 1), dtype=jnp.float32) * 0.1
    bias = jax.random.normal(k_b, (C_out,), dtype=jnp.float32) * 0.1
    weight = weight_full[:, :, 0]  # (H2, 28)

    features = jax.random.normal(k_x, (B, T, hidden_lstm_2), dtype=jnp.float32)

    out = tae_decoder_forward(features, weight, bias)
    out = jax.block_until_ready(out)

    # Reference (same semantics as PyTorch ConvTranspose1d k=1, s=1 + permutes)
    ref = jnp.einsum("bth,hc->btc", features, weight) + bias[None, None, :]
    assert out.shape == (B, T, C_out)
    assert jnp.allclose(out, ref, atol=1e-5, rtol=1e-5)

    # Also exercise the multi-step grid + padded tail block path (M = 3000, TM = 2048).
    B2, T2 = 3, 1000
    f2 = jax.random.normal(k_x, (B2, T2, hidden_lstm_2), dtype=jnp.float32)
    out2 = jax.block_until_ready(tae_decoder_forward(f2, weight, bias))
    ref2 = jnp.einsum("bth,hc->btc", f2, weight) + bias[None, None, :]
    assert out2.shape == (B2, T2, C_out)
    assert jnp.allclose(out2, ref2, atol=1e-5, rtol=1e-5)

    print("KERNEL_OK")
</pallas_src>

<mosaic_0001>
module attributes {stable_mosaic.version = 11 : i64} {
  func.func @_deconv1x1_kernel(%arg0: i32, %arg1: memref<16x32xf32, #tpu.memory_space<vmem>>, %arg2: memref<32x28xf32, #tpu.memory_space<vmem>>, %arg3: memref<1x28xf32, #tpu.memory_space<vmem>>, %arg4: memref<16x28xf32, #tpu.memory_space<vmem>>) attributes {dimension_semantics = [#tpu.dimension_semantics<parallel>], iteration_bounds = array<i64: 1>, scalar_prefetch = 0 : i64, scratch_operands = 0 : i64, tpu.core_type = #tpu.core_type<tc>, window_params = [{transform_indices = @transform_0, window_bounds = array<i64: 16, 32>}, {pipeline_mode = #tpu.pipeline_mode<synchronous>, transform_indices = @transform_1, window_bounds = array<i64: 32, 28>}, {pipeline_mode = #tpu.pipeline_mode<synchronous>, transform_indices = @transform_2, window_bounds = array<i64: 1, 28>}, {transform_indices = @transform_3, window_bounds = array<i64: 16, 28>}]} {
    %c0 = arith.constant 0 : index
    %c0_0 = arith.constant 0 : index
    %0 = vector.load %arg1[%c0, %c0_0] : memref<16x32xf32, #tpu.memory_space<vmem>>, vector<16x32xf32>
    %c0_1 = arith.constant 0 : index
    %c0_2 = arith.constant 0 : index
    %1 = vector.load %arg2[%c0_1, %c0_2] : memref<32x28xf32, #tpu.memory_space<vmem>>, vector<32x28xf32>
    %cst = arith.constant dense<0.000000e+00> : vector<16x28xf32>
    %2 = tpu.matmul %0, %1, %cst {dimension_numbers = #tpu.dot_dimension_numbers<[1], [0], [0], [1], [0, 0, 1, 1], [], []>} : vector<16x32xf32>, vector<32x28xf32>, vector<16x28xf32> -> vector<16x28xf32>
    %c0_3 = arith.constant 0 : index
    %c0_4 = arith.constant 0 : index
    %3 = vector.load %arg3[%c0_3, %c0_4] : memref<1x28xf32, #tpu.memory_space<vmem>>, vector<1x28xf32>
    %4 = vector.broadcast %3 : vector<1x28xf32> to vector<16x28xf32>
    %5 = arith.addf %2, %4 : vector<16x28xf32>
    %c0_5 = arith.constant 0 : index
    %c0_6 = arith.constant 0 : index
    %6 = vector.load %arg4[%c0_5, %c0_6] : memref<16x28xf32, #tpu.memory_space<vmem>>, vector<16x28xf32>
    tpu.vector_store %arg4[%c0_5, %c0_6], %5 {strides = array<i32>} : memref<16x28xf32, #tpu.memory_space<vmem>>, vector<16x28xf32>,
    return
  }
  func.func @transform_0(%arg0: i32) -> (i32, i32) {
    %c0_i32 = arith.constant 0 : i32
    %c0_i32_0 = arith.constant 0 : i32
    return %arg0, %c0_i32 : i32, i32
  }
  func.func @transform_1(%arg0: i32) -> (i32, i32) {
    %c0_i32 = arith.constant 0 : i32
    %c0_i32_0 = arith.constant 0 : i32
    %c0_i32_1 = arith.constant 0 : i32
    return %c0_i32, %c0_i32_0 : i32, i32
  }
  func.func @transform_2(%arg0: i32) -> (i32, i32) {
    %c0_i32 = arith.constant 0 : i32
    %c0_i32_0 = arith.constant 0 : i32
    %c0_i32_1 = arith.constant 0 : i32
    return %c0_i32, %c0_i32_0 : i32, i32
  }
  func.func @transform_3(%arg0: i32) -> (i32, i32) {
    %c0_i32 = arith.constant 0 : i32
    %c0_i32_0 = arith.constant 0 : i32
    return %arg0, %c0_i32 : i32, i32
  }
}

</mosaic_0001>

<llo_original>
// kernel: tpu_custom_call.1
$region0: #{tpu_custom_call.1}
  #allocation0 [shape = 'u32[]', space=smem, size = 0x4, offset = 0x4, fixed_abs, tag = 'smem constant byte address 0x4 - core index']
  #allocation1 [shape = 'u32[72,128]{1,0:T(1,128)}', space=vmem, size = 0x9000, scoped, tag = 'internal scratch']
  %s0 = inlined_call_operand.hbm [shape: f32[16,32], index: 0, kind: input, shape index: {}]
  %s1 = inlined_call_operand.hbm [shape: f32[32,28], index: 1, kind: input, shape index: {}]
  %s2 = inlined_call_operand.vmem [shape: f32[1,28], index: 2, kind: input, shape index: {}]
  %s3 = inlined_call_operand.hbm [shape: f32[16,28], index: 3, kind: output, shape index: {}]
  %s4 = sld [smem:[#allocation0]]
  $region30: #{tpu_custom_call.1} parent=0
    _
  %s6 = ssub.s32 1, %s4
  %s7 = scalar_select 0, %s6, %s4
  $region1: #{tpu_custom_call.1} parent=0
    #allocation2 [shape = 'u8[8192]{0}', space=vmem, size = 0x2000, scoped, tag = 'input window, operand 0, single buffered']
    #allocation3 [shape = 's32[1]{0}', space=sflag, size = 0x4, scoped, tag = 'scoped memory for tpu_custom_call.1']
    #allocation4 [shape = 's32[1]{0}', space=sflag, size = 0x4, scoped, tag = 'scoped memory for tpu_custom_call.1']
    #allocation5 [shape = 'u8[16384]{0}', space=vmem, size = 0x4000, scoped, tag = 'input window, operand 1, single buffered']
    #allocation6 [shape = 's32[1]{0}', space=sflag, size = 0x4, scoped, tag = 'scoped memory for tpu_custom_call.1']
    #allocation7 [shape = 'u8[8192]{0}', space=vmem, size = 0x2000, scoped, tag = 'output window, operand 0, single buffered']
    %8 = vsyncpa [#allocation3], 0
    %9 = vsyncpa [#allocation6], 0
    %10 = vsyncpa [#allocation4], 0
    // Predicated region
    $region2: #{tpu_custom_call.1} parent=1 // pred_check
      _
    $region3: #{tpu_custom_call.1} parent=1 // pred_check_branch
      %12 = sbr.rel (0) target = $region5
    $region4: #{tpu_custom_call.1} parent=1 // pred_region
      %14 = vsyncadd [#allocation3], 0
      %s15 = sshll.u32 %s0, 4
      %s16 = int_to_ptr.hbm [resolvable:$true] %s15
      %s17 = sshll.u32 [#allocation2], 4
      %s18 = int_to_ptr.vmem [resolvable:$true] %s17
      %23 = dma.hbm_to_vmem [thread:$0]  %s16, 256, %s18, [#allocation3], 128, 128, 8
    $region5: #{tpu_custom_call.1} parent=1 // pred_fallthru
      _
    // Predicated region
    $region6: #{tpu_custom_call.1} parent=1 // pred_check
      _
    $region7: #{tpu_custom_call.1} parent=1 // pred_check_branch
      %25 = sbr.rel (0) target = $region9
    $region8: #{tpu_custom_call.1} parent=1 // pred_region
      %27 = vsyncadd [#allocation6], 0
      %s28 = sshll.u32 %s1, 4
      %s29 = int_to_ptr.hbm [resolvable:$true] %s28
      %s30 = sshll.u32 [#allocation5], 4
      %s31 = int_to_ptr.vmem [resolvable:$true] %s30
      %36 = dma.hbm_to_vmem [thread:$0]  %s29, 512, %s31, [#allocation6], 128, 128, 8
    $region9: #{tpu_custom_call.1} parent=1 // pred_fallthru
      _
    // Predicated region
    $region10: #{tpu_custom_call.1} parent=1 // pred_check
      _
    $region11: #{tpu_custom_call.1} parent=1 // pred_check_branch
      %38 = sbr.rel (0) target = $region13
    $region12: #{tpu_custom_call.1} parent=1 // pred_region
      _
    $region13: #{tpu_custom_call.1} parent=1 // pred_fallthru
      _
    // Predicated region
    $region14: #{tpu_custom_call.1} parent=1 // pred_check
      _
    $region15: #{tpu_custom_call.1} parent=1 // pred_check_branch
      %40 = sbr.rel (0) target = $region17
    $region16: #{tpu_custom_call.1} parent=1 // pred_region
      %42 = dma.done [#allocation3], 256
    $region17: #{tpu_custom_call.1} parent=1 // pred_fallthru
      _
    // Predicated region
    $region18: #{tpu_custom_call.1} parent=1 // pred_check
      _
    $region19: #{tpu_custom_call.1} parent=1 // pred_check_branch
      %44 = sbr.rel (0) target = $region21
    $region20: #{tpu_custom_call.1} parent=1 // pred_region
      %46 = dma.done [#allocation6], 512
    $region21: #{tpu_custom_call.1} parent=1 // pred_fallthru
      _
    %v47 = vld [vmem:[#allocation2] sm:$0xff]
    %v48 = vld [vmem:[#allocation2 + $0x8] sm:$0xff]
    %v49 = vld [vmem:[#allocation5] sm:$0xff]
    %v50 = vld [vmem:[#allocation5 + $0x8] sm:$0xff]
    %v51 = vld [vmem:[#allocation5 + $0x10] sm:$0xff]
    %v52 = vld [vmem:[#allocation5 + $0x18] sm:$0xff]
    %v53 = vld [vmem:[%s2] sm:$0x1]
    %v55 = vperm.slane %v53, 0
    %vm57 = vcmask 261120
    %v59 = vsel %vm57, %v47, 0
    %v62 = vsel %vm57, %v48, 0
    %64 = vmatpush.msra.mxu0 0.0
    %65 = vmatpush.msra.mxu0 0.0
    %66 = vmatpush.msra.mxu0 0.0
    %67 = vmatpush.msra.mxu0 0.0
    %68 = vmatpush.msra.mxu0 0.0
    %69 = vmatpush.msra.mxu0 0.0
    %70 = vmatpush.msra.mxu0 0.0
    %71 = vmatpush.msra.mxu0 0.0
    %72 = vmatpush.msra.mxu0 0.0
    %73 = vmatpush.msra.mxu0 0.0
    %74 = vmatpush.msra.mxu0 0.0
    %75 = vmatpush.msra.mxu0 0.0
    %76 = vmatpush.msra.mxu0 %v52
    %77 = vmatpush.msra.mxu0 %v51
    %78 = vmatpush.msra.mxu0 %v50
    %79 = vmatpush.msra.mxu0 %v49
    %80 = vmatmul.f32.gmra.mxu0 %v59
    %v81 = vpop.f32.mrf.mxu0
    %v82 = vadd.f32 %v55, %v81
    %83 = vmatmul.f32.gmra.mxu0 %v62
    %v84 = vpop.f32.mrf.mxu0
    %v85 = vadd.f32 %v55, %v84
    %86 = vdwg.mxu0
    %vm87 = vcmask 228352
    %88 = vst.msk [vmem:[#allocation7] sm:$0xff] %vm87, %v82
    %89 = vst.msk [vmem:[#allocation7 + $0x8] sm:$0xff] %vm87, %v85
    // Predicated region
    $region22: #{tpu_custom_call.1} parent=1 // pred_check
      _
    $region23: #{tpu_custom_call.1} parent=1 // pred_check_branch
      %91 = sbr.rel (0) target = $region25
    $region24: #{tpu_custom_call.1} parent=1 // pred_region
      %93 = vsyncadd [#allocation4], 0
      %s94 = sshll.u32 [#allocation7], 4
      %s95 = int_to_ptr.vmem [resolvable:$true] %s94
      %s96 = sshll.u32 %s3, 4
      %s97 = int_to_ptr.hbm [resolvable:$true] %s96
      %102 = dma.vmem_to_hbm [thread:$0]  %s95, 256, %s97, [#allocation4], 128, 128, 8
    $region25: #{tpu_custom_call.1} parent=1 // pred_fallthru
      _
    // Predicated region
    $region26: #{tpu_custom_call.1} parent=1 // pred_check
      _
    $region27: #{tpu_custom_call.1} parent=1 // pred_check_branch
      %104 = sbr.rel (0) target = $region29
    $region28: #{tpu_custom_call.1} parent=1 // pred_region
      %106 = dma.done [#allocation4], 256
    $region29: #{tpu_custom_call.1} parent=1 // pred_fallthru
      _
    %107 = vsyncpa [#allocation3], 1
    %108 = vsyncpa [#allocation6], 1
    %109 = vsyncpa [#allocation4], 1

</llo_original>
